<compile_context>
chip_gen: v6e
topology: v6e:2x2x1
jax: 0.10.0
libtpu: 0.0.40
codegen_flags: <defaults>
</compile_context>

<pallas_src>
import jax
import jax.numpy as jnp
from jax.experimental import pallas as pl
from jax.experimental.pallas import tpu as pltpu

_LANE = 128


def _round_up(n, m):
    return ((n + m - 1) // m) * m


def _dann_kernel(x_ref, w1_ref, b1_ref, w2_ref, b2_ref, w3_ref, b3_ref, o_ref):
    # Layer 1: bf16 MXU matmul with f32 accumulation; bias + ReLU in f32.
    h1 = jnp.dot(x_ref[...], w1_ref[...], preferred_element_type=jnp.float32)
    h1 = jnp.maximum(h1 + b1_ref[...], 0.0)

    # Layer 2: cast the activation to bf16 for the MXU, accumulate in f32.
    h2 = jnp.dot(h1.astype(jnp.bfloat16), w2_ref[...],
                 preferred_element_type=jnp.float32)
    h2 = jnp.maximum(h2 + b2_ref[...], 0.0)

    # Layer 3: single output column -> f32 VPU multiply + XLU lane reduction
    # (avoids an N=1 MXU push/drain).  w3 is a (1, H) f32 row, b3 an SMEM scalar.
    h3 = jnp.sum(h2 * w3_ref[...], axis=-1, keepdims=True) + b3_ref[0, 0]
    o_ref[...] = jax.nn.sigmoid(h3).astype(o_ref.dtype)       # (tb, 1)


def discriminator_dann_forward(x, params, *, block_b=512):
    """Fused DANN-discriminator forward.

    x: [B, in_feature] float32
    params: dict with weights already transposed to [in, out], the hidden
            width padded to a multiple of 128, w1/w2 in bf16:
              w1 [in_pad, H] bf16, b1 [1, H] f32, w2 [H, H] bf16, b2 [1, H] f32,
              w3 [1, H] f32, b3 [1, 1] f32
    Returns: [B, 1] float32.
    """
    B, in_feature = x.shape
    in_pad, H = params["w1"].shape
    assert H % _LANE == 0, "hidden width must be padded to a multiple of 128"

    # Stream x to HBM/VMEM in bf16; zero-pad features only if w1 was padded
    # (large, non-128-multiple in_feature).  Tiny in_feature stays unpadded.
    x = x.astype(jnp.bfloat16)
    if in_pad != in_feature:
        x = jnp.pad(x, ((0, 0), (0, in_pad - in_feature)))

    # Batch tile: aim for >=2 grid steps (v7x shards the "parallel" axis over
    # its 2 TensorCores), capped at block_b; pad B so the grid divides evenly.
    if B <= 2 * block_b:
        tb = max(8, _round_up(-(-B // 2), 8))
    else:
        tb = block_b
    b_pad = _round_up(B, tb)
    if b_pad != B:
        x = jnp.pad(x, ((0, b_pad - B), (0, 0)))
    grid = (b_pad // tb,)

    in_specs = [
        pl.BlockSpec((tb, in_pad), lambda i: (i, 0)),        # x: tiled on batch
        pl.BlockSpec((in_pad, H), lambda i: (0, 0)),         # w1 (bf16, resident)
        pl.BlockSpec((1, H), lambda i: (0, 0)),              # b1 (f32)
        pl.BlockSpec((H, H), lambda i: (0, 0)),              # w2 (bf16, resident)
        pl.BlockSpec((1, H), lambda i: (0, 0)),              # b2 (f32)
        pl.BlockSpec((1, H), lambda i: (0, 0)),              # w3 row (f32)
        pl.BlockSpec(memory_space=pltpu.MemorySpace.SMEM),   # b3: scalar in SMEM
    ]
    out_specs = pl.BlockSpec((tb, 1), lambda i: (i, 0))      # narrow (B,1) output

    # Advisory cost hint for the XLA scheduler.
    param_bytes = sum(int(params[k].size) * params[k].dtype.itemsize
                      for k in ("w1", "b1", "w2", "b2", "w3", "b3"))
    flops = 2 * b_pad * (in_pad * H + H * H + H)
    bytes_accessed = int(x.size) * x.dtype.itemsize + param_bytes + b_pad * 4
    cost = pl.CostEstimate(flops=flops, transcendentals=b_pad,
                           bytes_accessed=bytes_accessed)

    # Explicit scoped-VMEM budget: double-buffered streamed tiles, the (still
    # double-buffered) grid-invariant params, f32 h1/h2 intermediates, slack.
    vmem_limit = int(2 * tb * in_pad * 2        # x tile (bf16), 2 buffers
                     + 2 * param_bytes          # invariant weights / biases
                     + 2 * tb * 4               # out tile (f32), 2 buffers
                     + 2 * tb * H * 4           # h1 / h2 f32 intermediates
                     + (4 << 20))               # compiler scratch headroom

    out = pl.pallas_call(
        _dann_kernel,
        out_shape=jax.ShapeDtypeStruct((b_pad, 1), jnp.float32),
        grid=grid,
        in_specs=in_specs,
        out_specs=out_specs,
        compiler_params=pltpu.CompilerParams(
            dimension_semantics=("parallel",),
            vmem_limit_bytes=vmem_limit),
        cost_estimate=cost,
    )(x, params["w1"], params["b1"], params["w2"], params["b2"],
      params["w3"], params["b3"])

    return out[:B]


def init_params(key, in_feature, hidden_size):
    """PyTorch-equivalent init; weights stored transposed [in, out], hidden
    width (hidden_size + 1) zero-padded to a multiple of 128, and the two
    matmul weights cast to bf16 for the MXU stream."""
    h1 = hidden_size + 1
    H = _round_up(h1, _LANE)
    # Only pad large feature dims; padding tiny in_feature just wastes HBM BW.
    in_pad = _round_up(in_feature, _LANE) if in_feature > _LANE else in_feature
    k1, k2, k3 = jax.random.split(key, 3)

    # PyTorch Linear stores weight as [out, in]; store transposed + padded.
    w1_t = (0.01 * jax.random.normal(k1, (h1, in_feature), jnp.float32)).T
    w1 = jnp.zeros((in_pad, H), jnp.float32).at[:in_feature, :h1].set(w1_t)
    b1 = jnp.zeros((1, H), jnp.float32)

    w2_t = (0.01 * jax.random.normal(k2, (h1, h1), jnp.float32)).T
    w2 = jnp.zeros((H, H), jnp.float32).at[:h1, :h1].set(w2_t)
    b2 = jnp.zeros((1, H), jnp.float32)

    w3_row = 0.3 * jax.random.normal(k3, (1, h1), jnp.float32)   # [out=1, in]
    w3 = jnp.zeros((1, H), jnp.float32).at[:, :h1].set(w3_row)
    b3 = jnp.zeros((1, 1), jnp.float32)

    return {"w1": w1.astype(jnp.bfloat16), "b1": b1,
            "w2": w2.astype(jnp.bfloat16), "b2": b2,
            "w3": w3, "b3": b3}


def reference_forward(x, p):
    """Pure-JAX reference mirroring the kernel's bf16-input / f32-accumulate
    numerics (same padded params)."""
    in_feature = x.shape[1]
    w1 = p["w1"][:in_feature].astype(jnp.float32)
    xb = x.astype(jnp.bfloat16).astype(jnp.float32)
    h1 = jnp.maximum(xb @ w1 + p["b1"], 0.0)
    h1b = h1.astype(jnp.bfloat16).astype(jnp.float32)
    h2 = jnp.maximum(h1b @ p["w2"].astype(jnp.float32) + p["b2"], 0.0)
    return jax.nn.sigmoid(h2 @ p["w3"].T + p["b3"])


if __name__ == "__main__":
    key = jax.random.PRNGKey(0)
    k_x, k_p = jax.random.split(key)

    batch = 8
    in_feature = 32
    hidden_size = 32   # -> internal width 33, zero-padded to 128 in init_params

    x = jax.random.normal(k_x, (batch, in_feature), jnp.float32)
    params = init_params(k_p, in_feature, hidden_size)

    out = jax.block_until_ready(discriminator_dann_forward(x, params))
    ref = reference_forward(x, params)

    assert out.shape == (batch, 1), out.shape
    assert jnp.allclose(out, ref, atol=1e-3, rtol=1e-3), \
        ("max abs err", jnp.max(jnp.abs(out - ref)))

    print("KERNEL_OK")
</pallas_src>

<mosaic_0001>
module attributes {stable_mosaic.version = 11 : i64} {
  func.func @_dann_kernel(%arg0: i32, %arg1: memref<8x32xbf16, #tpu.memory_space<vmem>>, %arg2: memref<32x128xbf16, #tpu.memory_space<vmem>>, %arg3: memref<1x128xf32, #tpu.memory_space<vmem>>, %arg4: memref<128x128xbf16, #tpu.memory_space<vmem>>, %arg5: memref<1x128xf32, #tpu.memory_space<vmem>>, %arg6: memref<1x128xf32, #tpu.memory_space<vmem>>, %arg7: memref<1x1xf32, #tpu.memory_space<smem>>, %arg8: memref<8x1xf32, #tpu.memory_space<vmem>>) attributes {dimension_semantics = [#tpu.dimension_semantics<parallel>], iteration_bounds = array<i64: 1>, scalar_prefetch = 0 : i64, scratch_operands = 0 : i64, tpu.core_type = #tpu.core_type<tc>, window_params = [{transform_indices = @transform_0, window_bounds = array<i64: 8, 32>}, {pipeline_mode = #tpu.pipeline_mode<synchronous>, transform_indices = @transform_1, window_bounds = array<i64: 32, 128>}, {pipeline_mode = #tpu.pipeline_mode<synchronous>, transform_indices = @transform_2, window_bounds = array<i64: 1, 128>}, {pipeline_mode = #tpu.pipeline_mode<synchronous>, transform_indices = @transform_3, window_bounds = array<i64: 128, 128>}, {pipeline_mode = #tpu.pipeline_mode<synchronous>, transform_indices = @transform_4, window_bounds = array<i64: 1, 128>}, {pipeline_mode = #tpu.pipeline_mode<synchronous>, transform_indices = @transform_5, window_bounds = array<i64: 1, 128>}, {transform_indices = @transform_6, window_bounds = array<i64: 1, 1>}, {transform_indices = @transform_7, window_bounds = array<i64: 8, 1>}]} {
    %c0 = arith.constant 0 : index
    %c0_0 = arith.constant 0 : index
    %0 = vector.load %arg1[%c0, %c0_0] : memref<8x32xbf16, #tpu.memory_space<vmem>>, vector<8x32xbf16>
    %c0_1 = arith.constant 0 : index
    %c0_2 = arith.constant 0 : index
    %1 = vector.load %arg2[%c0_1, %c0_2] : memref<32x128xbf16, #tpu.memory_space<vmem>>, vector<32x128xbf16>
    %cst = arith.constant dense<0.000000e+00> : vector<8x128xf32>
    %2 = tpu.matmul %0, %1, %cst {dimension_numbers = #tpu.dot_dimension_numbers<[1], [0], [0], [1], [0, 0, 1, 1], [], []>} : vector<8x32xbf16>, vector<32x128xbf16>, vector<8x128xf32> -> vector<8x128xf32>
    %c0_3 = arith.constant 0 : index
    %c0_4 = arith.constant 0 : index
    %3 = vector.load %arg3[%c0_3, %c0_4] : memref<1x128xf32, #tpu.memory_space<vmem>>, vector<1x128xf32>
    %4 = vector.broadcast %3 : vector<1x128xf32> to vector<8x128xf32>
    %5 = arith.addf %2, %4 : vector<8x128xf32>
    %cst_5 = arith.constant 0.000000e+00 : f32
    %6 = vector.broadcast %cst_5 : f32 to vector<8x128xf32>
    %7 = arith.maximumf %5, %6 : vector<8x128xf32>
    %8 = arith.truncf %7 : vector<8x128xf32> to vector<8x128xbf16>
    %c0_6 = arith.constant 0 : index
    %c0_7 = arith.constant 0 : index
    %9 = vector.load %arg4[%c0_6, %c0_7] : memref<128x128xbf16, #tpu.memory_space<vmem>>, vector<128x128xbf16>
    %cst_8 = arith.constant dense<0.000000e+00> : vector<8x128xf32>
    %10 = tpu.matmul %8, %9, %cst_8 {dimension_numbers = #tpu.dot_dimension_numbers<[1], [0], [0], [1], [0, 0, 1, 1], [], []>} : vector<8x128xbf16>, vector<128x128xbf16>, vector<8x128xf32> -> vector<8x128xf32>
    %c0_9 = arith.constant 0 : index
    %c0_10 = arith.constant 0 : index
    %11 = vector.load %arg5[%c0_9, %c0_10] : memref<1x128xf32, #tpu.memory_space<vmem>>, vector<1x128xf32>
    %12 = vector.broadcast %11 : vector<1x128xf32> to vector<8x128xf32>
    %13 = arith.addf %10, %12 : vector<8x128xf32>
    %cst_11 = arith.constant 0.000000e+00 : f32
    %14 = vector.broadcast %cst_11 : f32 to vector<8x128xf32>
    %15 = arith.maximumf %13, %14 : vector<8x128xf32>
    %c0_12 = arith.constant 0 : index
    %c0_13 = arith.constant 0 : index
    %16 = vector.load %arg6[%c0_12, %c0_13] : memref<1x128xf32, #tpu.memory_space<vmem>>, vector<1x128xf32>
    %17 = vector.broadcast %16 : vector<1x128xf32> to vector<8x128xf32>
    %18 = arith.mulf %15, %17 : vector<8x128xf32>
    %cst_14 = arith.constant dense<0.000000e+00> : vector<8xf32>
    %19 = vector.multi_reduction <add>, %18, %cst_14 [1] : vector<8x128xf32> to vector<8xf32>
    %20 = vector.shape_cast %19 : vector<8xf32> to vector<8x1xf32>
    %c0_15 = arith.constant 0 : index
    %c0_16 = arith.constant 0 : index
    %21 = memref.load %arg7[%c0_15, %c0_16] : memref<1x1xf32, #tpu.memory_space<smem>>
    %22 = vector.broadcast %21 : f32 to vector<8x1xf32>
    %23 = arith.addf %20, %22 : vector<8x1xf32>
    %24 = arith.negf %23 : vector<8x1xf32>
    %25 = math.exp %24 : vector<8x1xf32>
    %cst_17 = arith.constant 1.000000e+00 : f32
    %26 = vector.broadcast %cst_17 : f32 to vector<8x1xf32>
    %27 = arith.addf %26, %25 : vector<8x1xf32>
    %28 = arith.divf %26, %27 : vector<8x1xf32>
    %c0_18 = arith.constant 0 : index
    %c0_19 = arith.constant 0 : index
    %29 = vector.load %arg8[%c0_18, %c0_19] : memref<8x1xf32, #tpu.memory_space<vmem>>, vector<8x1xf32>
    tpu.vector_store %arg8[%c0_18, %c0_19], %28 {strides = array<i32>} : memref<8x1xf32, #tpu.memory_space<vmem>>, vector<8x1xf32>,
    return
  }
  func.func @transform_0(%arg0: i32) -> (i32, i32) {
    %c0_i32 = arith.constant 0 : i32
    %c0_i32_0 = arith.constant 0 : i32
    return %arg0, %c0_i32 : i32, i32
  }
  func.func @transform_1(%arg0: i32) -> (i32, i32) {
    %c0_i32 = arith.constant 0 : i32
    %c0_i32_0 = arith.constant 0 : i32
    %c0_i32_1 = arith.constant 0 : i32
    return %c0_i32, %c0_i32_0 : i32, i32
  }
  func.func @transform_2(%arg0: i32) -> (i32, i32) {
    %c0_i32 = arith.constant 0 : i32
    %c0_i32_0 = arith.constant 0 : i32
    %c0_i32_1 = arith.constant 0 : i32
    return %c0_i32, %c0_i32_0 : i32, i32
  }
  func.func @transform_3(%arg0: i32) -> (i32, i32) {
    %c0_i32 = arith.constant 0 : i32
    %c0_i32_0 = arith.constant 0 : i32
    %c0_i32_1 = arith.constant 0 : i32
    return %c0_i32, %c0_i32_0 : i32, i32
  }
  func.func @transform_4(%arg0: i32) -> (i32, i32) {
    %c0_i32 = arith.constant 0 : i32
    %c0_i32_0 = arith.constant 0 : i32
    %c0_i32_1 = arith.constant 0 : i32
    return %c0_i32, %c0_i32_0 : i32, i32
  }
  func.func @transform_5(%arg0: i32) -> (i32, i32) {
    %c0_i32 = arith.constant 0 : i32
    %c0_i32_0 = arith.constant 0 : i32
    %c0_i32_1 = arith.constant 0 : i32
    return %c0_i32, %c0_i32_0 : i32, i32
  }
  func.func @transform_6(%arg0: i32) -> (i32, i32) {
    %c0_i32 = arith.constant 0 : i32
    %c0_i32_0 = arith.constant 0 : i32
    %c0_i32_1 = arith.constant 0 : i32
    return %c0_i32, %c0_i32_0 : i32, i32
  }
  func.func @transform_7(%arg0: i32) -> (i32, i32) {
    %c0_i32 = arith.constant 0 : i32
    %c0_i32_0 = arith.constant 0 : i32
    return %arg0, %c0_i32 : i32, i32
  }
}

</mosaic_0001>

<llo_original>
// kernel: tpu_custom_call.1
$region0: #{tpu_custom_call.1}
  #allocation0 [shape = 'u32[]', space=smem, size = 0x4, offset = 0x4, fixed_abs, tag = 'smem constant byte address 0x4 - core index']
  #allocation1 [shape = 'u32[144,128]{1,0:T(1,128)}', space=vmem, size = 0x12000, scoped, tag = 'internal scratch']
  #allocation2 [shape = 'f32[1,1]{1,0:T(1,128)S(6)}', space=smem, size = 0x200, scoped, tag = 'scoped memory for tpu_custom_call.1']
  %s0 = inlined_call_operand.hbm [shape: bf16[8,32], index: 0, kind: input, shape index: {}]
  %s1 = inlined_call_operand.hbm [shape: bf16[32,128], index: 1, kind: input, shape index: {}]
  %s2 = inlined_call_operand.vmem [shape: f32[1,128], index: 2, kind: input, shape index: {}]
  %s3 = inlined_call_operand.hbm [shape: bf16[128,128], index: 3, kind: input, shape index: {}]
  %s4 = inlined_call_operand.vmem [shape: f32[1,128], index: 4, kind: input, shape index: {}]
  %s5 = inlined_call_operand.vmem [shape: f32[1,128], index: 5, kind: input, shape index: {}]
  %s6 = inlined_call_operand.<no memory space> [shape: f32[1,1], index: 6, kind: input, shape index: {}]
  %s7 = inlined_call_operand.vmem [shape: f32[8,1], index: 7, kind: output, shape index: {}]
  %s8 = sld [smem:[#allocation0]]
  $region50: #{tpu_custom_call.1} parent=0
    _
  %s10 = ssub.s32 1, %s8
  %s11 = scalar_select 0, %s10, %s8
  %12 = sst [smem:[#allocation2]] %s6
  $region1: #{tpu_custom_call.1} parent=0
    #allocation3 [shape = 'u8[2048]{0}', space=vmem, size = 0x800, scoped, tag = 'input window, operand 0, single buffered']
    #allocation4 [shape = 's32[1]{0}', space=sflag, size = 0x4, scoped, tag = 'scoped memory for tpu_custom_call.1']
    #allocation5 [shape = 'u8[8192]{0}', space=vmem, size = 0x2000, scoped, tag = 'input window, operand 1, single buffered']
    #allocation6 [shape = 's32[1]{0}', space=sflag, size = 0x4, scoped, tag = 'scoped memory for tpu_custom_call.1']
    #allocation7 [shape = 'u8[32768]{0}', space=vmem, size = 0x8000, scoped, tag = 'input window, operand 3, single buffered']
    %13 = vsyncpa [#allocation4], 0
    %14 = vsyncpa [#allocation6], 0
    // Predicated region
    $region2: #{tpu_custom_call.1} parent=1 // pred_check
      _
    $region3: #{tpu_custom_call.1} parent=1 // pred_check_branch
      %16 = sbr.rel (0) target = $region5
    $region4: #{tpu_custom_call.1} parent=1 // pred_region
      %s18 = ssub.s32 64, 64
      %19 = vsyncadd [#allocation4], %s18
      %s21 = sshll.u32 [#allocation3], 4
      %s22 = int_to_ptr.vmem [resolvable:$true] %s21
      %24 = dma.hbm_to_vmem [thread:$0]  %s0, 64, %s22, [#allocation4]
    $region5: #{tpu_custom_call.1} parent=1 // pred_fallthru
      _
    // Predicated region
    $region6: #{tpu_custom_call.1} parent=1 // pred_check
      _
    $region7: #{tpu_custom_call.1} parent=1 // pred_check_branch
      %26 = sbr.rel (0) target = $region9
    $region8: #{tpu_custom_call.1} parent=1 // pred_region
      %s28 = ssub.s32 256, 256
      %29 = vsyncadd [#allocation6], %s28
      %s30 = sshll.u32 [#allocation5], 4
      %s31 = int_to_ptr.vmem [resolvable:$true] %s30
      %36 = dma.hbm_to_vmem [thread:$0]  %s1, 256, %s31, [#allocation6], 64, 64, 4
    $region9: #{tpu_custom_call.1} parent=1 // pred_fallthru
      _
    // Predicated region
    $region10: #{tpu_custom_call.1} parent=1 // pred_check
      _
    $region11: #{tpu_custom_call.1} parent=1 // pred_check_branch
      %38 = sbr.rel (0) target = $region13
    $region12: #{tpu_custom_call.1} parent=1 // pred_region
      _
    $region13: #{tpu_custom_call.1} parent=1 // pred_fallthru
      _
    // Predicated region
    $region14: #{tpu_custom_call.1} parent=1 // pred_check
      _
    $region15: #{tpu_custom_call.1} parent=1 // pred_check_branch
      %40 = sbr.rel (0) target = $region17
    $region16: #{tpu_custom_call.1} parent=1 // pred_region
      %s42 = ssub.s32 1024, 1024
      %43 = vsyncadd [#allocation6], %s42
      %s44 = sshll.u32 [#allocation7], 4
      %s45 = int_to_ptr.vmem [resolvable:$true] %s44
      %50 = dma.hbm_to_vmem [thread:$0]  %s3, 1024, %s45, [#allocation6], 64, 64, 4
    $region17: #{tpu_custom_call.1} parent=1 // pred_fallthru
      _
    // Predicated region
    $region18: #{tpu_custom_call.1} parent=1 // pred_check
      _
    $region19: #{tpu_custom_call.1} parent=1 // pred_check_branch
      %52 = sbr.rel (0) target = $region21
    $region20: #{tpu_custom_call.1} parent=1 // pred_region
      _
    $region21: #{tpu_custom_call.1} parent=1 // pred_fallthru
      _
    // Predicated region
    $region22: #{tpu_custom_call.1} parent=1 // pred_check
      _
    $region23: #{tpu_custom_call.1} parent=1 // pred_check_branch
      %54 = sbr.rel (0) target = $region25
    $region24: #{tpu_custom_call.1} parent=1 // pred_region
      _
    $region25: #{tpu_custom_call.1} parent=1 // pred_fallthru
      _
    // Predicated region
    $region26: #{tpu_custom_call.1} parent=1 // pred_check
      _
    $region27: #{tpu_custom_call.1} parent=1 // pred_check_branch
      %56 = sbr.rel (0) target = $region29
    $region28: #{tpu_custom_call.1} parent=1 // pred_region
      _
    $region29: #{tpu_custom_call.1} parent=1 // pred_fallthru
      _
    // Predicated region
    $region30: #{tpu_custom_call.1} parent=1 // pred_check
      _
    $region31: #{tpu_custom_call.1} parent=1 // pred_check_branch
      %58 = sbr.rel (0) target = $region33
    $region32: #{tpu_custom_call.1} parent=1 // pred_region
      %59 = dma.done [#allocation4], 64
    $region33: #{tpu_custom_call.1} parent=1 // pred_fallthru
      _
    // Predicated region
    $region34: #{tpu_custom_call.1} parent=1 // pred_check
      _
    $region35: #{tpu_custom_call.1} parent=1 // pred_check_branch
      %61 = sbr.rel (0) target = $region37
    $region36: #{tpu_custom_call.1} parent=1 // pred_region
      %62 = dma.done [#allocation6], 256
    $region37: #{tpu_custom_call.1} parent=1 // pred_fallthru
      _
    // Predicated region
    $region38: #{tpu_custom_call.1} parent=1 // pred_check
      _
    $region39: #{tpu_custom_call.1} parent=1 // pred_check_branch
      %64 = sbr.rel (0) target = $region41
    $region40: #{tpu_custom_call.1} parent=1 // pred_region
      %65 = dma.done [#allocation6], 1024
    $region41: #{tpu_custom_call.1} parent=1 // pred_fallthru
      _
    %v67 = vld [vmem:[#allocation3] sm:$0xf]
    %v68 = vld [vmem:[#allocation5] sm:$0xf]
    %v69 = vld [vmem:[#allocation5 + $0x4] sm:$0xf]
    %v70 = vld [vmem:[#allocation5 + $0x8] sm:$0xf]
    %v71 = vld [vmem:[#allocation5 + $0xc] sm:$0xf]
    %v72 = vld [vmem:[%s2] sm:$0x1]
    %v74 = vlaneseq
    %v75 = vshrl.u32 %v74, 7
    %v76 = vsub.s32 0, %v75
    %v77 = vrot.slane %v72, %v76
    %v83 = vunpack.c.l.b16 %v68
    %v84 = vunpack.c.l.b16 %v69
    %v85 = vunpack.c.l.b16 %v70
    %v86 = vunpack.c.l.b16 %v71
    %v87 = vpack.c.b16 %v84, %v83
    %v88 = vpack.c.b16 %v86, %v85
    %vm91 = vcmask 261120
    %v93 = vsel %vm91, %v67, 0
    %95 = vmatprep.subr.bf16.mxu0 0
    %96 = vmatpush1.bf16.msra.mxu0 0
    %97 = vmatprep.subr.bf16.mxu0 0
    %98 = vmatpush1.bf16.msra.mxu0 0
    %99 = vmatprep.subr.bf16.mxu0 0
    %100 = vmatpush1.bf16.msra.mxu0 0
    %101 = vmatprep.subr.bf16.mxu0 0
    %102 = vmatpush1.bf16.msra.mxu0 0
    %103 = vmatprep.subr.bf16.mxu0 0
    %104 = vmatpush1.bf16.msra.mxu0 0
    %105 = vmatprep.subr.bf16.mxu0 0
    %106 = vmatpush1.bf16.msra.mxu0 0
    %107 = vmatprep.subr.bf16.mxu0 0
    %108 = vmatpush1.bf16.msra.mxu0 %v88
    %109 = vmatprep.subr.bf16.mxu0 0
    %110 = vmatpush1.bf16.msra.mxu0 %v87
    %111 = vmatprep.subr.bf16.mxu0 0
    %112 = vmatpush2.bf16.msra.mxu0 0
    %113 = vmatprep.subr.bf16.mxu0 0
    %114 = vmatpush2.bf16.msra.mxu0 0
    %115 = vmatprep.subr.bf16.mxu0 0
    %116 = vmatpush2.bf16.msra.mxu0 0
    %117 = vmatprep.subr.bf16.mxu0 0
    %118 = vmatpush2.bf16.msra.mxu0 0
    %119 = vmatprep.subr.bf16.mxu0 0
    %120 = vmatpush2.bf16.msra.mxu0 0
    %121 = vmatprep.subr.bf16.mxu0 0
    %122 = vmatpush2.bf16.msra.mxu0 0
    %123 = vmatprep.subr.bf16.mxu0 0
    %124 = vmatpush2.bf16.msra.mxu0 0
    %125 = vmatprep.subr.bf16.mxu0 0
    %126 = vmatpush2.bf16.msra.mxu0 0
    %127 = vmatprep.mubr.bf16.mxu0 0
    %128 = vmatmul.mubr.bf16.gmra.mxu0 %v93
    %v129 = vpop.f32.mrf.mxu0
    %v130 = vadd.f32 %v77, %v129
    %v131 = vpop.f32.mrf.mxu0
    %v132 = vpop.f32.mrf.mxu0
    %v133 = vpop.f32.mrf.mxu0
    %134 = vdwg.mxu0
    %v135 = vmax.f32 %v130, 0.0
    %v136 = vpack.c.bf16 %v135, %v135
    %v137 = vld [vmem:[#allocation7] sm:$0xf]
    %v138 = vld [vmem:[#allocation7 + $0x4] sm:$0xf]
    %v139 = vld [vmem:[#allocation7 + $0x8] sm:$0xf]
    %v140 = vld [vmem:[#allocation7 + $0xc] sm:$0xf]
    %v141 = vld [vmem:[#allocation7 + $0x10] sm:$0xf]
    %v142 = vld [vmem:[#allocation7 + $0x14] sm:$0xf]
    %v143 = vld [vmem:[#allocation7 + $0x18] sm:$0xf]
    %v144 = vld [vmem:[#allocation7 + $0x1c] sm:$0xf]
    %v145 = vld [vmem:[#allocation7 + $0x20] sm:$0xf]
    %v146 = vld [vmem:[#allocation7 + $0x24] sm:$0xf]
    %v147 = vld [vmem:[#allocation7 + $0x28] sm:$0xf]
    %v148 = vld [vmem:[#allocation7 + $0x2c] sm:$0xf]
    %v149 = vld [vmem:[#allocation7 + $0x30] sm:$0xf]
    %v150 = vld [vmem:[#allocation7 + $0x34] sm:$0xf]
    %v151 = vld [vmem:[#allocation7 + $0x38] sm:$0xf]
    %v152 = vld [vmem:[#allocation7 + $0x3c] sm:$0xf]
    %v153 = vld [vmem:[%s4] sm:$0x1]
    %v155 = vlaneseq
    %v156 = vshrl.u32 %v155, 7
    %v157 = vsub.s32 0, %v156
    %v158 = vrot.slane %v153, %v157
    %v176 = vunpack.c.l.b16 %v137
    %v177 = vunpack.c.l.b16 %v138
    %v178 = vunpack.c.l.b16 %v139
    %v179 = vunpack.c.l.b16 %v140
    %v180 = vunpack.c.l.b16 %v141
    %v181 = vunpack.c.l.b16 %v142
    %v182 = vunpack.c.l.b16 %v143
    %v183 = vunpack.c.l.b16 %v144
    %v184 = vunpack.c.l.b16 %v145
    %v185 = vunpack.c.l.b16 %v146
    %v186 = vunpack.c.l.b16 %v147
    %v187 = vunpack.c.l.b16 %v148
    %v188 = vunpack.c.l.b16 %v149
    %v189 = vunpack.c.l.b16 %v150
    %v190 = vunpack.c.l.b16 %v151
    %v191 = vunpack.c.l.b16 %v152
    %v192 = vpack.c.b16 %v177, %v176
    %v193 = vpack.c.b16 %v179, %v178
    %v194 = vpack.c.b16 %v181, %v180
    %v195 = vpack.c.b16 %v183, %v182
    %v196 = vpack.c.b16 %v185, %v184
    %v197 = vpack.c.b16 %v187, %v186
    %v198 = vpack.c.b16 %v189, %v188
    %v199 = vpack.c.b16 %v191, %v190
    %208 = vmatprep.subr.bf16.mxu0 0
    %209 = vmatpush1.bf16.msra.mxu0 %v199
    %210 = vmatprep.subr.bf16.mxu0 0
    %211 = vmatpush1.bf16.msra.mxu0 %v198
    %212 = vmatprep.subr.bf16.mxu0 0
    %213 = vmatpush1.bf16.msra.mxu0 %v197
    %214 = vmatprep.subr.bf16.mxu0 0
    %215 = vmatpush1.bf16.msra.mxu0 %v196
    %216 = vmatprep.subr.bf16.mxu0 0
    %217 = vmatpush1.bf16.msra.mxu0 %v195
    %218 = vmatprep.subr.bf16.mxu0 0
    %219 = vmatpush1.bf16.msra.mxu0 %v194
    %220 = vmatprep.subr.bf16.mxu0 0
    %221 = vmatpush1.bf16.msra.mxu0 %v193
    %222 = vmatprep.subr.bf16.mxu0 0
    %223 = vmatpush1.bf16.msra.mxu0 %v192
    %224 = vmatprep.subr.bf16.mxu0 0
    %225 = vmatpush2.bf16.msra.mxu0 0
    %226 = vmatprep.subr.bf16.mxu0 0
    %227 = vmatpush2.bf16.msra.mxu0 0
    %228 = vmatprep.subr.bf16.mxu0 0
    %229 = vmatpush2.bf16.msra.mxu0 0
    %230 = vmatprep.subr.bf16.mxu0 0
    %231 = vmatpush2.bf16.msra.mxu0 0
    %232 = vmatprep.subr.bf16.mxu0 0
    %233 = vmatpush2.bf16.msra.mxu0 0
    %234 = vmatprep.subr.bf16.mxu0 0
    %235 = vmatpush2.bf16.msra.mxu0 0
    %236 = vmatprep.subr.bf16.mxu0 0
    %237 = vmatpush2.bf16.msra.mxu0 0
    %238 = vmatprep.subr.bf16.mxu0 0
    %239 = vmatpush2.bf16.msra.mxu0 0
    %240 = vmatprep.mubr.bf16.mxu0 0
    %241 = vmatmul.mubr.bf16.gmra.mxu0 %v136
    %v242 = vpop.f32.mrf.mxu0
    %v243 = vadd.f32 %v158, %v242
    %v244 = vpop.f32.mrf.mxu0
    %v245 = vpop.f32.mrf.mxu0
    %v246 = vpop.f32.mrf.mxu0
    %247 = vdwg.mxu0
    %v248 = vmax.f32 %v243, 0.0
    %v249 = vld [vmem:[%s5] sm:$0x1]
    %v251 = vlaneseq
    %v252 = vshrl.u32 %v251, 7
    %v253 = vsub.s32 0, %v252
    %v254 = vrot.slane %v249, %v253
    %v256 = vmul.f32 %v248, %v254
    %257 = vadd.xlane.f32.xlu0 %v256
    %v258 = vpop.xlane.xlu0 %257
    %s259 = sld [smem:[#allocation2]]
    %v260 = vstv %s259
    %v261 = vadd.f32 %v258, %v260
    %v262 = vxor.u32 %v261, 2147483648
    %v263 = vmul.f32 %v262, 1.442695
    %v264 = vpow.pop %v263
    %v265 = vadd.f32 %v264, 1.0
    %v266 = vrcp.pop %v265
    %v267 = vmul.f32 1.0, %v266
    %vm268 = vcmask 7168
    %269 = vst.msk [vmem:[%s7] sm:$0xff] %vm268, %v267
    // Predicated region
    $region42: #{tpu_custom_call.1} parent=1 // pred_check
      _
    $region43: #{tpu_custom_call.1} parent=1 // pred_check_branch
      %271 = sbr.rel (0) target = $region45
    $region44: #{tpu_custom_call.1} parent=1 // pred_region
      _
    $region45: #{tpu_custom_call.1} parent=1 // pred_fallthru
      _
    // Predicated region
    $region46: #{tpu_custom_call.1} parent=1 // pred_check
      _
    $region47: #{tpu_custom_call.1} parent=1 // pred_check_branch
      %273 = sbr.rel (0) target = $region49
    $region48: #{tpu_custom_call.1} parent=1 // pred_region
      _
    $region49: #{tpu_custom_call.1} parent=1 // pred_fallthru
      _
    %274 = vsyncpa [#allocation4], 1
    %275 = vsyncpa [#allocation6], 1

</llo_original>
